<compile_context>
chip_gen: v5e
topology: v5e:2x2
jax: 0.10.0
libtpu: 0.0.40
codegen_flags: <defaults>
</compile_context>

<pallas_src>
import jax
import jax.numpy as jnp
from jax.experimental import pallas as pl
from jax.experimental.pallas import tpu as pltpu


LANE = 128


def _round_up(x: int, m: int) -> int:
    return ((x + m - 1) // m) * m


def _default_batch_tile(n: int) -> int:
    """Largest multiple of 8 that divides n, capped at 1024; prefer >=2 grid
    steps (v7x megacore) when the batch allows it."""
    cap = min(n, 1024)
    if n >= 16:
        cap = min(cap, n // 2)  # keep at least 2 grid steps
    bt = (cap // 8) * 8
    while bt >= 8 and n % bt != 0:
        bt -= 8
    if bt < 8 or n % bt != 0:
        bt = n  # fall back to one full-batch tile (block == full array is legal)
    return bt


def make_mlp_kernel(layer_out_dims, neg_slope: float = 0.01):
    """Fused MLP kernel: z -> (Linear + LeakyReLU)*(L-1) -> Linear + tanh.

    layer_out_dims are the (possibly lane-padded) per-layer output widths.
    Weights arrive in bf16; biases arrive as one stacked f32 (L, 128) ref.
    """
    n_layers = len(layer_out_dims)

    def kernel(z_ref, *refs):
        w_refs = refs[:n_layers]          # bf16 (in_l, out_l) each, VMEM-resident
        b_ref = refs[n_layers]            # f32 (n_layers, bias_width)
        out_ref = refs[n_layers + 1]

        h = z_ref[...].astype(jnp.float32)
        for layer in range(n_layers):
            out_d = layer_out_dims[layer]
            w = w_refs[layer][...]                                   # bf16
            b = b_ref[layer:layer + 1, :out_d]                       # (1, out_d) f32
            # bf16 operands into the MXU, f32 accumulation.
            h = jnp.dot(h.astype(jnp.bfloat16), w,
                        preferred_element_type=jnp.float32) + b
            if layer < n_layers - 1:
                # LeakyReLU (torch default negative_slope=0.01), kept in f32.
                h = jnp.where(h >= 0, h, neg_slope * h)
            else:
                h = jnp.tanh(h)
        out_ref[...] = h.astype(out_ref.dtype)

    return kernel


def generator_forward(z, weights, biases, *, batch_tile=None):
    """Run the fused MLP Pallas kernel on latent samples z of shape (N, latent_dim)."""
    n_layers = len(weights)
    N, latent_dim = z.shape
    out_dim = weights[-1].shape[1]

    # ---- Lane-dense final layer: pad last W/b to a multiple of 128 lanes ----
    out_pad = _round_up(max(out_dim, LANE), LANE)
    w_last = jnp.zeros((weights[-1].shape[0], out_pad), jnp.float32)
    w_last = w_last.at[:, :out_dim].set(weights[-1].astype(jnp.float32))
    b_last = jnp.zeros((out_pad,), jnp.float32).at[:out_dim].set(
        biases[-1].astype(jnp.float32))
    padded_w = [w.astype(jnp.float32) for w in weights[:-1]] + [w_last]
    padded_b = [b.astype(jnp.float32) for b in biases[:-1]] + [b_last]

    layer_out_dims = tuple(int(w.shape[1]) for w in padded_w)

    # ---- Pack all biases into a single f32 (n_layers, width) ref ----
    bias_width = _round_up(max(max(layer_out_dims), LANE), LANE)
    b_all = jnp.zeros((n_layers, bias_width), jnp.float32)
    for l, b in enumerate(padded_b):
        b_all = b_all.at[l, :b.shape[0]].set(b)

    # ---- Weights cast to bf16 once (MXU-native on v5e/v6e/v7x) ----
    w_args = [w.astype(jnp.bfloat16) for w in padded_w]

    # ---- Batch tiling ----
    if batch_tile is None:
        batch_tile = _default_batch_tile(N)
    assert N % batch_tile == 0, "batch must be divisible by batch_tile"
    assert batch_tile % 8 == 0 or batch_tile == N, \
        "batch_tile must be a multiple of 8 (f32 sublane rule) or the full batch"
    grid = (N // batch_tile,)

    # z is tiled along batch; weights/biases are full-array blocks (exempt from
    # the (8,128) rule) with constant index_map -> resident across the grid.
    # NOTE: at larger hidden_size consider pipeline_mode=pl.Buffered(1) on the
    # constant-index weight specs to avoid double-buffered resident weights
    # (matters most on v7x's 64 MiB VMEM); irrelevant at these tiny sizes.
    in_specs = [pl.BlockSpec((batch_tile, latent_dim), lambda i: (i, 0))]
    for w in w_args:
        in_specs.append(pl.BlockSpec(w.shape, lambda i: (0, 0)))
    in_specs.append(pl.BlockSpec(b_all.shape, lambda i: (0, 0)))

    out_specs = pl.BlockSpec((batch_tile, out_pad), lambda i: (i, 0))

    kernel = make_mlp_kernel(layer_out_dims)

    out_padded = pl.pallas_call(
        kernel,
        grid=grid,
        in_specs=in_specs,
        out_specs=out_specs,
        out_shape=jax.ShapeDtypeStruct((N, out_pad), jnp.float32),
        compiler_params=pltpu.CompilerParams(
            dimension_semantics=("parallel",),
            vmem_limit_bytes=32 * 1024 * 1024,
        ),
    )(z, *w_args, b_all)

    # Strip the lane padding of the final layer.
    return out_padded[:, :out_dim]


def init_generator_params(key, latent_dim, n_hidden, hidden_size, output_dim):
    """Deterministic synthetic init matching nn.Linear shapes (stored as (in, out))."""
    dims = [latent_dim] + [hidden_size] * n_hidden + [output_dim]
    weights, biases = [], []
    for i in range(len(dims) - 1):
        key, wk, bk = jax.random.split(key, 3)
        fan_in = dims[i]
        bound = 1.0 / jnp.sqrt(fan_in)
        # torch nn.Linear default: kaiming-uniform weight, uniform(-1/sqrt(fan_in)) bias
        w = jax.random.uniform(wk, (dims[i], dims[i + 1]), jnp.float32, -bound, bound)
        b = jax.random.uniform(bk, (dims[i + 1],), jnp.float32, -bound, bound)
        weights.append(w)
        biases.append(b)
    return weights, biases


def reference_forward(z, weights, biases):
    """Plain-JAX reference mirroring the kernel's math (bf16 operands, f32 accum)."""
    h = z.astype(jnp.float32)
    for l, (w, b) in enumerate(zip(weights, biases)):
        h = jnp.dot(h.astype(jnp.bfloat16), w.astype(jnp.bfloat16),
                    preferred_element_type=jnp.float32) + b.astype(jnp.float32)
        if l < len(weights) - 1:
            h = jnp.where(h >= 0, h, 0.01 * h)
        else:
            h = jnp.tanh(h)
    return h


if __name__ == "__main__":
    # Small shapes consistent with the module's forward(n).
    latent_dim = 16
    n_hidden = 2
    hidden_size = 32
    output_dim = 4
    n = 64  # batch size passed to Generator.forward

    key = jax.random.PRNGKey(0)
    pkey, zkey = jax.random.split(key)

    weights, biases = init_generator_params(
        pkey, latent_dim, n_hidden, hidden_size, output_dim
    )

    # z ~ N(0, I): the random sampling (torch.normal) is glue, done in plain JAX.
    z = jax.random.normal(zkey, (n, latent_dim), dtype=jnp.float32)

    out = generator_forward(z, weights, biases)  # default tile -> grid of 2 steps
    out = jax.block_until_ready(out)

    ref = reference_forward(z, weights, biases)
    assert out.shape == (n, output_dim)
    assert jnp.allclose(out, ref, atol=1e-4, rtol=1e-4), "mismatch vs reference"

    print("KERNEL_OK")
</pallas_src>

<mosaic_0001>
module attributes {stable_mosaic.version = 11 : i64} {
  func.func @kernel(%arg0: i32, %arg1: memref<32x16xf32, #tpu.memory_space<vmem>>, %arg2: memref<16x32xbf16, #tpu.memory_space<vmem>>, %arg3: memref<32x32xbf16, #tpu.memory_space<vmem>>, %arg4: memref<32x128xbf16, #tpu.memory_space<vmem>>, %arg5: memref<3x128xf32, #tpu.memory_space<vmem>>, %arg6: memref<32x128xf32, #tpu.memory_space<vmem>>) attributes {dimension_semantics = [#tpu.dimension_semantics<parallel>], iteration_bounds = array<i64: 2>, scalar_prefetch = 0 : i64, scratch_operands = 0 : i64, tpu.core_type = #tpu.core_type<tc>, window_params = [{transform_indices = @transform_0, window_bounds = array<i64: 32, 16>}, {pipeline_mode = #tpu.pipeline_mode<synchronous>, transform_indices = @transform_1, window_bounds = array<i64: 16, 32>}, {pipeline_mode = #tpu.pipeline_mode<synchronous>, transform_indices = @transform_2, window_bounds = array<i64: 32, 32>}, {pipeline_mode = #tpu.pipeline_mode<synchronous>, transform_indices = @transform_3, window_bounds = array<i64: 32, 128>}, {pipeline_mode = #tpu.pipeline_mode<synchronous>, transform_indices = @transform_4, window_bounds = array<i64: 3, 128>}, {transform_indices = @transform_5, window_bounds = array<i64: 32, 128>}]} {
    %c0 = arith.constant 0 : index
    %c0_0 = arith.constant 0 : index
    %0 = vector.load %arg1[%c0, %c0_0] : memref<32x16xf32, #tpu.memory_space<vmem>>, vector<32x16xf32>
    %c0_1 = arith.constant 0 : index
    %c0_2 = arith.constant 0 : index
    %1 = vector.load %arg2[%c0_1, %c0_2] : memref<16x32xbf16, #tpu.memory_space<vmem>>, vector<16x32xbf16>
    %c0_3 = arith.constant 0 : index
    %c0_4 = arith.constant 0 : index
    %2 = vector.load %arg5[%c0_3, %c0_4] : memref<3x128xf32, #tpu.memory_space<vmem>>, vector<1x32xf32>
    %3 = arith.truncf %0 : vector<32x16xf32> to vector<32x16xbf16>
    %cst = arith.constant dense<0.000000e+00> : vector<32x32xf32>
    %4 = tpu.matmul %3, %1, %cst {dimension_numbers = #tpu.dot_dimension_numbers<[1], [0], [0], [1], [0, 0, 1, 1], [], []>} : vector<32x16xbf16>, vector<16x32xbf16>, vector<32x32xf32> -> vector<32x32xf32>
    %5 = vector.broadcast %2 : vector<1x32xf32> to vector<32x32xf32>
    %6 = arith.addf %4, %5 : vector<32x32xf32>
    %cst_5 = arith.constant 0.000000e+00 : f32
    %7 = vector.broadcast %cst_5 : f32 to vector<32x32xf32>
    %8 = arith.cmpf oge, %6, %7 : vector<32x32xf32>
    %cst_6 = arith.constant 0.00999999977 : f32
    %9 = vector.broadcast %cst_6 : f32 to vector<32x32xf32>
    %10 = arith.mulf %9, %6 : vector<32x32xf32>
    %11 = arith.select %8, %6, %10 : vector<32x32xi1>, vector<32x32xf32>
    %c0_7 = arith.constant 0 : index
    %c0_8 = arith.constant 0 : index
    %12 = vector.load %arg3[%c0_7, %c0_8] : memref<32x32xbf16, #tpu.memory_space<vmem>>, vector<32x32xbf16>
    %c1 = arith.constant 1 : index
    %c0_9 = arith.constant 0 : index
    %13 = vector.load %arg5[%c1, %c0_9] : memref<3x128xf32, #tpu.memory_space<vmem>>, vector<1x32xf32>
    %14 = arith.truncf %11 : vector<32x32xf32> to vector<32x32xbf16>
    %cst_10 = arith.constant dense<0.000000e+00> : vector<32x32xf32>
    %15 = tpu.matmul %14, %12, %cst_10 {dimension_numbers = #tpu.dot_dimension_numbers<[1], [0], [0], [1], [0, 0, 1, 1], [], []>} : vector<32x32xbf16>, vector<32x32xbf16>, vector<32x32xf32> -> vector<32x32xf32>
    %16 = vector.broadcast %13 : vector<1x32xf32> to vector<32x32xf32>
    %17 = arith.addf %15, %16 : vector<32x32xf32>
    %cst_11 = arith.constant 0.000000e+00 : f32
    %18 = vector.broadcast %cst_11 : f32 to vector<32x32xf32>
    %19 = arith.cmpf oge, %17, %18 : vector<32x32xf32>
    %cst_12 = arith.constant 0.00999999977 : f32
    %20 = vector.broadcast %cst_12 : f32 to vector<32x32xf32>
    %21 = arith.mulf %20, %17 : vector<32x32xf32>
    %22 = arith.select %19, %17, %21 : vector<32x32xi1>, vector<32x32xf32>
    %c0_13 = arith.constant 0 : index
    %c0_14 = arith.constant 0 : index
    %23 = vector.load %arg4[%c0_13, %c0_14] : memref<32x128xbf16, #tpu.memory_space<vmem>>, vector<32x128xbf16>
    %c2 = arith.constant 2 : index
    %c0_15 = arith.constant 0 : index
    %24 = vector.load %arg5[%c2, %c0_15] : memref<3x128xf32, #tpu.memory_space<vmem>>, vector<1x128xf32>
    %25 = arith.truncf %22 : vector<32x32xf32> to vector<32x32xbf16>
    %cst_16 = arith.constant dense<0.000000e+00> : vector<32x128xf32>
    %26 = tpu.matmul %25, %23, %cst_16 {dimension_numbers = #tpu.dot_dimension_numbers<[1], [0], [0], [1], [0, 0, 1, 1], [], []>} : vector<32x32xbf16>, vector<32x128xbf16>, vector<32x128xf32> -> vector<32x128xf32>
    %27 = vector.broadcast %24 : vector<1x128xf32> to vector<32x128xf32>
    %28 = arith.addf %26, %27 : vector<32x128xf32>
    %29 = math.tanh %28 : vector<32x128xf32>
    %c0_17 = arith.constant 0 : index
    %c0_18 = arith.constant 0 : index
    %30 = vector.load %arg6[%c0_17, %c0_18] : memref<32x128xf32, #tpu.memory_space<vmem>>, vector<32x128xf32>
    tpu.vector_store %arg6[%c0_17, %c0_18], %29 {strides = array<i32>} : memref<32x128xf32, #tpu.memory_space<vmem>>, vector<32x128xf32>,
    return
  }
  func.func @transform_0(%arg0: i32) -> (i32, i32) {
    %c0_i32 = arith.constant 0 : i32
    %c0_i32_0 = arith.constant 0 : i32
    return %arg0, %c0_i32 : i32, i32
  }
  func.func @transform_1(%arg0: i32) -> (i32, i32) {
    %c0_i32 = arith.constant 0 : i32
    %c0_i32_0 = arith.constant 0 : i32
    %c0_i32_1 = arith.constant 0 : i32
    return %c0_i32, %c0_i32_0 : i32, i32
  }
  func.func @transform_2(%arg0: i32) -> (i32, i32) {
    %c0_i32 = arith.constant 0 : i32
    %c0_i32_0 = arith.constant 0 : i32
    %c0_i32_1 = arith.constant 0 : i32
    return %c0_i32, %c0_i32_0 : i32, i32
  }
  func.func @transform_3(%arg0: i32) -> (i32, i32) {
    %c0_i32 = arith.constant 0 : i32
    %c0_i32_0 = arith.constant 0 : i32
    %c0_i32_1 = arith.constant 0 : i32
    return %c0_i32, %c0_i32_0 : i32, i32
  }
  func.func @transform_4(%arg0: i32) -> (i32, i32) {
    %c0_i32 = arith.constant 0 : i32
    %c0_i32_0 = arith.constant 0 : i32
    %c0_i32_1 = arith.constant 0 : i32
    return %c0_i32, %c0_i32_0 : i32, i32
  }
  func.func @transform_5(%arg0: i32) -> (i32, i32) {
    %c0_i32 = arith.constant 0 : i32
    %c0_i32_0 = arith.constant 0 : i32
    return %arg0, %c0_i32 : i32, i32
  }
}

</mosaic_0001>

<llo_original>
// kernel: tpu_custom_call.1
$region0: #{tpu_custom_call.1}
  #allocation0 [shape = 'u32[]', space=smem, size = 0x4, offset = 0x4, fixed_abs, tag = 'smem constant byte address 0x4 - core index']
  #allocation1 [shape = 'u32[72,128]{1,0:T(1,128)}', space=vmem, size = 0x9000, scoped, tag = 'internal scratch']
  %s0 = inlined_call_operand.vmem [shape: f32[64,16], index: 0, kind: input, shape index: {}]
  %s1 = inlined_call_operand.vmem [shape: bf16[16,32], index: 1, kind: input, shape index: {}]
  %s2 = inlined_call_operand.vmem [shape: bf16[32,32], index: 2, kind: input, shape index: {}]
  %s3 = inlined_call_operand.vmem [shape: bf16[32,128], index: 3, kind: input, shape index: {}]
  %s4 = inlined_call_operand.vmem [shape: f32[3,128], index: 4, kind: input, shape index: {}]
  %s5 = inlined_call_operand.hbm [shape: f32[64,128], index: 5, kind: output, shape index: {}]
  %s6 = sld [smem:[#allocation0]]
  $region53: #{tpu_custom_call.1} parent=0
    _
  %s8 = ssub.s32 1, %s6
  %s9 = scalar_select 0, %s8, %s6
  $region1: #{tpu_custom_call.1} parent=0
    #allocation2 [shape = 'u8[32768]{0}', space=vmem, size = 0x8000, scoped, tag = 'output window, operand 0']
    #allocation3 [shape = 's32[2]{0}', space=sflag, size = 0x8, scoped, tag = 'scoped memory for tpu_custom_call.1']
    %10 = vsyncpa [#allocation3], 0
    %s11 = scalar_lea.sflag [#allocation3], 1
    %12 = vsyncpa %s11, 0
    loop: start=0, step=1, limit=4
    $region2: #{tpu_custom_call.1} parent=1 // loop_pre_header
      _
    $region3: #{tpu_custom_call.1} parent=1 // loop_header
      %s14 = sphi 0, %s18
      %p15 = scmp.ge.s32.totalorder %s14, 4
      %s24 = sphi 0, %s26
      %s27 = sphi 0, %s24
      %s28 = sphi 0, %s27
      %s44 = sphi 0, %s28
      %s48 = sphi 0, %s48
      %s50 = sphi 0, %s48
      %s51 = sphi 0, %s50
      %s65 = sphi 0, %s51
      %s69 = sphi 0, %s69
      %s71 = sphi 0, %s69
      %s72 = sphi 0, %s71
      %s86 = sphi 0, %s72
      %s90 = sphi 0, %s90
      %s92 = sphi 0, %s90
      %s93 = sphi 0, %s92
      %s107 = sphi 0, %s93
      %s111 = sphi 0, %s111
      %s113 = sphi 0, %s111
      %s114 = sphi 0, %s113
      %s128 = sphi 0, %s114
      %s134 = sphi 0, %s136
      %s137 = sphi 0, %s134
      %s138 = sphi 0, %s137
      %s154 = sphi 0, %s138
    $region4: #{tpu_custom_call.1} parent=1 // loop_header_branch
      %17 = sbr.rel (%p15) target = $region8
    $region5: #{tpu_custom_call.1} parent=1 // loop_body
      %s19 = ssub.s32 %s14, 1
      %s20 = ssub.s32 %s14, 2
      %s21 = sadd.s32 %s14, 1
      %s22 = ssub.s32 %s14, %s21
      %p23 = scmp.eq.s32.totalorder %s22, 0
      %s25 = sadd.s32 %s24, 1
      %s26 = scalar_select %p23, %s24, %s25
      %p29 = pneg %p23
      %p30 = scmp.eq.s32.totalorder %s14, 1
      %p31 = por %p29, %p30
      %p32 = scmp.ne.s32.totalorder %s24, %s27
      %p33 = scmp.eq.s32.totalorder %s14, 0
      %p34 = por %p32, %p33
      %p35 = scmp.ne.s32.totalorder %s24, %s27
      %p36 = scmp.eq.s32.totalorder %s19, 1
      %p37 = por %p35, %p36
      %p38 = scmp.ne.s32.totalorder %s27, %s28
      %p39 = scmp.eq.s32.totalorder %s19, 0
      %p40 = por %p38, %p39
      %p41 = scmp.ne.s32.totalorder %s27, %s28
      %p42 = scmp.eq.s32.totalorder %s20, 1
      %p43 = por %p41, %p42
      %p45 = scmp.ne.s32.totalorder %s28, %s44
      %p46 = scmp.eq.s32.totalorder %s20, 0
      %p47 = por %p45, %p46
      %s49 = sadd.s32 %s48, 1
      %p52 = scmp.eq.s32.totalorder %s14, 1
      %p53 = scmp.ne.s32.totalorder %s48, %s50
      %p54 = scmp.eq.s32.totalorder %s14, 0
      %p55 = por %p53, %p54
      %p56 = scmp.ne.s32.totalorder %s48, %s50
      %p57 = scmp.eq.s32.totalorder %s19, 1
      %p58 = por %p56, %p57
      %p59 = scmp.ne.s32.totalorder %s50, %s51
      %p60 = scmp.eq.s32.totalorder %s19, 0
      %p61 = por %p59, %p60
      %p62 = scmp.ne.s32.totalorder %s50, %s51
      %p63 = scmp.eq.s32.totalorder %s20, 1
      %p64 = por %p62, %p63
      %p66 = scmp.ne.s32.totalorder %s51, %s65
      %p67 = scmp.eq.s32.totalorder %s20, 0
      %p68 = por %p66, %p67
      %s70 = sadd.s32 %s69, 1
      %p73 = scmp.eq.s32.totalorder %s14, 1
      %p74 = scmp.ne.s32.totalorder %s69, %s71
      %p75 = scmp.eq.s32.totalorder %s14, 0
      %p76 = por %p74, %p75
      %p77 = scmp.ne.s32.totalorder %s69, %s71
      %p78 = scmp.eq.s32.totalorder %s19, 1
      %p79 = por %p77, %p78
      %p80 = scmp.ne.s32.totalorder %s71, %s72
      %p81 = scmp.eq.s32.totalorder %s19, 0
      %p82 = por %p80, %p81
      %p83 = scmp.ne.s32.totalorder %s71, %s72
      %p84 = scmp.eq.s32.totalorder %s20, 1
      %p85 = por %p83, %p84
      %p87 = scmp.ne.s32.totalorder %s72, %s86
      %p88 = scmp.eq.s32.totalorder %s20, 0
      %p89 = por %p87, %p88
      %s91 = sadd.s32 %s90, 1
      %p94 = scmp.eq.s32.totalorder %s14, 1
      %p95 = scmp.ne.s32.totalorder %s90, %s92
      %p96 = scmp.eq.s32.totalorder %s14, 0
      %p97 = por %p95, %p96
      %p98 = scmp.ne.s32.totalorder %s90, %s92
      %p99 = scmp.eq.s32.totalorder %s19, 1
      %p100 = por %p98, %p99
      %p101 = scmp.ne.s32.totalorder %s92, %s93
      %p102 = scmp.eq.s32.totalorder %s19, 0
      %p103 = por %p101, %p102
      %p104 = scmp.ne.s32.totalorder %s92, %s93
      %p105 = scmp.eq.s32.totalorder %s20, 1
      %p106 = por %p104, %p105
      %p108 = scmp.ne.s32.totalorder %s93, %s107
      %p109 = scmp.eq.s32.totalorder %s20, 0
      %p110 = por %p108, %p109
      %s112 = sadd.s32 %s111, 1
      %p115 = scmp.eq.s32.totalorder %s14, 1
      %p116 = scmp.ne.s32.totalorder %s111, %s113
      %p117 = scmp.eq.s32.totalorder %s14, 0
      %p118 = por %p116, %p117
      %p119 = scmp.ne.s32.totalorder %s111, %s113
      %p120 = scmp.eq.s32.totalorder %s19, 1
      %p121 = por %p119, %p120
      %p122 = scmp.ne.s32.totalorder %s113, %s114
      %p123 = scmp.eq.s32.totalorder %s19, 0
      %p124 = por %p122, %p123
      %p125 = scmp.ne.s32.totalorder %s113, %s114
      %p126 = scmp.eq.s32.totalorder %s20, 1
      %p127 = por %p125, %p126
      %p129 = scmp.ne.s32.totalorder %s114, %s128
      %p130 = scmp.eq.s32.totalorder %s20, 0
      %p131 = por %p129, %p130
      %s132 = ssub.s32 %s14, %s21
      %p133 = scmp.eq.s32.totalorder %s132, 0
      %s135 = sadd.s32 %s134, 1
      %s136 = scalar_select %p133, %s134, %s135
      %p139 = pneg %p133
      %p140 = scmp.eq.s32.totalorder %s14, 1
      %p141 = por %p139, %p140
      %p142 = scmp.ne.s32.totalorder %s134, %s137
      %p143 = scmp.eq.s32.totalorder %s14, 0
      %p144 = por %p142, %p143
      %p145 = scmp.ne.s32.totalorder %s134, %s137
      %p146 = scmp.eq.s32.totalorder %s19, 1
      %p147 = por %p145, %p146
      %p148 = scmp.ne.s32.totalorder %s137, %s138
      %p149 = scmp.eq.s32.totalorder %s19, 0
      %p150 = por %p148, %p149
      %p151 = scmp.ne.s32.totalorder %s137, %s138
      %p152 = scmp.eq.s32.totalorder %s20, 1
      %p153 = por %p151, %p152
      %p155 = scmp.ne.s32.totalorder %s138, %s154
      %p156 = scmp.eq.s32.totalorder %s20, 0
      %p157 = por %p155, %p156
      %p158 = scmp.le.s32.totalorder 1, %s14
      %p159 = scmp.lt.s32.totalorder %s14, 3
      %p160 = pnand %p158, %p159
      %p161 = pneg %p160
      // Predicated region
      $region9: #{tpu_custom_call.1} parent=5 // pred_check
        _
      $region10: #{tpu_custom_call.1} parent=5 // pred_check_branch
        %163 = sbr.rel (%p160) target = $region12
      $region11: #{tpu_custom_call.1} parent=5 // pred_region
        %s164 = ssub.s32 %s14, 1
        // Predicated region
        $region13: #{tpu_custom_call.1} parent=11 // pred_check
          %p165 = pneg %p61
        $region14: #{tpu_custom_call.1} parent=11 // pred_check_branch
          %167 = sbr.rel (%p165) target = $region16
        $region15: #{tpu_custom_call.1} parent=11 // pred_region
          _
        $region16: #{tpu_custom_call.1} parent=11 // pred_fallthru
          _
        // Predicated region
        $region17: #{tpu_custom_call.1} parent=11 // pred_check
          %p168 = pneg %p82
        $region18: #{tpu_custom_call.1} parent=11 // pred_check_branch
          %170 = sbr.rel (%p168) target = $region20
        $region19: #{tpu_custom_call.1} parent=11 // pred_region
          _
        $region20: #{tpu_custom_call.1} parent=11 // pred_fallthru
          _
        // Predicated region
        $region21: #{tpu_custom_call.1} parent=11 // pred_check
          %p171 = pneg %p103
        $region22: #{tpu_custom_call.1} parent=11 // pred_check_branch
          %173 = sbr.rel (%p171) target = $region24
        $region23: #{tpu_custom_call.1} parent=11 // pred_region
          _
        $region24: #{tpu_custom_call.1} parent=11 // pred_fallthru
          _
        // Predicated region
        $region25: #{tpu_custom_call.1} parent=11 // pred_check
          %p174 = pneg %p124
        $region26: #{tpu_custom_call.1} parent=11 // pred_check_branch
          %176 = sbr.rel (%p174) target = $region28
        $region27: #{tpu_custom_call.1} parent=11 // pred_region
          _
        $region28: #{tpu_custom_call.1} parent=11 // pred_fallthru
          _
      $region12: #{tpu_custom_call.1} parent=5 // pred_fallthru
        _
      %p177 = scmp.lt.s32.totalorder %s14, 2
      // Predicated region
      $region29: #{tpu_custom_call.1} parent=5 // pred_check
        %p178 = pneg %p177
      $region30: #{tpu_custom_call.1} parent=5 // pred_check_branch
        %180 = sbr.rel (%p178) target = $region32
      $region31: #{tpu_custom_call.1} parent=5 // pred_region
        // Predicated region
        $region33: #{tpu_custom_call.1} parent=31 // pred_check
          %p181 = pneg %p34
        $region34: #{tpu_custom_call.1} parent=31 // pred_check_branch
          %183 = sbr.rel (%p181) target = $region36
        $region35: #{tpu_custom_call.1} parent=31 // pred_region
          %s184 = smul.u32 4, %s14
          %p185 = scmp.lt.s32.totalorder %s184, 7
          %s186 = scalar_select %p185, %s184, 7
          %s187 = smul.addr %s186, 8
          %s188 = scalar_lea.vmem %s0, %s187
          %s189 = smul.u32 4, %s14
        $region36: #{tpu_custom_call.1} parent=31 // pred_fallthru
          _
      $region32: #{tpu_custom_call.1} parent=5 // pred_fallthru
        _
      %p190 = scmp.le.s32.totalorder 1, %s14
      %p191 = scmp.lt.s32.totalorder %s14, 3
      %p192 = pnand %p190, %p191
      %p193 = pneg %p192
      // Predicated region
      $region37: #{tpu_custom_call.1} parent=5 // pred_check
        _
      $region38: #{tpu_custom_call.1} parent=5 // pred_check_branch
        %195 = sbr.rel (%p192) target = $region40
      $region39: #{tpu_custom_call.1} parent=5 // pred_region
        %s196 = ssub.s32 %s14, 1
        %s197 = smul.u32 4, %s19
        %p198 = scmp.lt.s32.totalorder %s197, 7
        %s199 = scalar_select %p198, %s197, 7
        %s200 = smul.addr %s199, 8
        %s201 = scalar_lea.vmem %s0, %s200
        %p202 = pneg %p40
        %p203 = pneg %p37
        %p204 = pneg %p61
        %p205 = pneg %p58
        %p206 = pneg %p82
        %p207 = pneg %p79
        %p208 = pneg %p103
        %p209 = pneg %p100
        %p210 = pneg %p124
        %p211 = pneg %p121
        %p212 = pneg %p150
        %p213 = pneg %p147
        %s214 = sand.u32 %s137, 1
        %s215 = scalar_lea.sflag [#allocation3], %s214
        %s216 = sand.u32 %s137, 1
        %s217 = smul.addr %s216, 32
        %s218 = scalar_lea.vmem [#allocation2], %s217
        %s219 = smul.u32 4, %s19
        %p220 = scmp.lt.s32.totalorder %s219, 7
        %s221 = scalar_select %p220, %s219, 7
        %s222 = smul.addr %s221, 8
        %s223 = scalar_lea.vmem %s0, %s222
        %s224 = smul.u32 4, %s19
        %s225 = smul.u32 4, %s19
        %v227 = vld [vmem:[%s223] sm:$0xff]
        %v228 = vld [vmem:[%s223 + $0x8] sm:$0xff]
        %v229 = vld [vmem:[%s223 + $0x10] sm:$0xff]
        %v230 = vld [vmem:[%s223 + $0x18] sm:$0xff]
        %v231 = vld [vmem:[%s1] sm:$0xf]
        %v232 = vld [vmem:[%s1 + $0x4] sm:$0xf]
        %v233 = vld [vmem:[%s4] sm:$0x1]
        %v234 = vpack.c.bf16 %v228, %v227
        %v235 = vpack.c.bf16 %v230, %v229
        %v236 = vperm.slane %v233, 0
        %v239 = vunpack.c.l.b16 %v231
        %v240 = vunpack.c.l.b16 %v232
        %v241 = vpack.c.b16 %v240, %v239
        %vm243 = vcmask 130048
        %v245 = vsel %vm243, %v234, 0
        %v248 = vsel %vm243, %v235, 0
        %250 = vmatpush.bf16.msra.mxu0 0
        %251 = vmatpush.bf16.msra.mxu0 0
        %252 = vmatpush.bf16.msra.mxu0 0
        %253 = vmatpush.bf16.msra.mxu0 0
        %254 = vmatpush.bf16.msra.mxu0 0
        %255 = vmatpush.bf16.msra.mxu0 0
        %256 = vmatpush.bf16.msra.mxu0 0
        %257 = vmatpush.bf16.msra.mxu0 %v241
        %258 = vmatmul.bf16.gmra.mxu0 %v245
        %v259 = vpop.f32.mrf.mxu0
        %v260 = vadd.f32 %v236, %v259
        %v261 = vpop.f32.mrf.mxu0
        %v262 = vadd.f32 %v236, %v261
        %263 = vmatmul.bf16.gmra.mxu0 %v248
        %v264 = vpop.f32.mrf.mxu0
        %v265 = vadd.f32 %v236, %v264
        %v266 = vpop.f32.mrf.mxu0
        %v267 = vadd.f32 %v236, %v266
        %268 = vdwg.mxu0
        %vm269 = vcmp.ge.f32.partialorder %v260, 0.0
        %vm270 = vcmp.ge.f32.partialorder %v262, 0.0
        %vm271 = vcmp.ge.f32.partialorder %v265, 0.0
        %vm272 = vcmp.ge.f32.partialorder %v267, 0.0
        %v273 = vmul.f32 %v260, 0.01
        %v274 = vmul.f32 %v262, 0.01
        %v275 = vmul.f32 %v265, 0.01
        %v276 = vmul.f32 %v267, 0.01
        %v277 = vsel %vm269, %v260, %v273
        %v278 = vsel %vm270, %v262, %v274
        %v279 = vsel %vm271, %v265, %v275
        %v280 = vsel %vm272, %v267, %v276
        %v281 = vld [vmem:[%s2] sm:$0xf]
        %v282 = vld [vmem:[%s2 + $0x4] sm:$0xf]
        %v283 = vld [vmem:[%s2 + $0x8] sm:$0xf]
        %v284 = vld [vmem:[%s2 + $0xc] sm:$0xf]
        %v285 = vld [vmem:[%s4 + $0x1] sm:$0x1]
        %v286 = vpack.c.bf16 %v278, %v277
        %v287 = vpack.c.bf16 %v280, %v279
        %v288 = vperm.slane %v285, 0
        %v293 = vunpack.c.l.b16 %v281
        %v294 = vunpack.c.l.b16 %v282
        %v295 = vunpack.c.l.b16 %v283
        %v296 = vunpack.c.l.b16 %v284
        %v297 = vpack.c.b16 %v294, %v293
        %v298 = vpack.c.b16 %v296, %v295
        %vm301 = vcmask 261120
        %v303 = vsel %vm301, %v286, 0
        %v306 = vsel %vm301, %v287, 0
        %308 = vmatpush.bf16.msra.mxu0 0
        %309 = vmatpush.bf16.msra.mxu0 0
        %310 = vmatpush.bf16.msra.mxu0 0
        %311 = vmatpush.bf16.msra.mxu0 0
        %312 = vmatpush.bf16.msra.mxu0 0
        %313 = vmatpush.bf16.msra.mxu0 0
        %314 = vmatpush.bf16.msra.mxu0 %v298
        %315 = vmatpush.bf16.msra.mxu0 %v297
        %316 = vmatmul.bf16.gmra.mxu0 %v303
        %v317 = vpop.f32.mrf.mxu0
        %v318 = vadd.f32 %v288, %v317
        %v319 = vpop.f32.mrf.mxu0
        %v320 = vadd.f32 %v288, %v319
        %321 = vmatmul.bf16.gmra.mxu0 %v306
        %v322 = vpop.f32.mrf.mxu0
        %v323 = vadd.f32 %v288, %v322
        %v324 = vpop.f32.mrf.mxu0
        %v325 = vadd.f32 %v288, %v324
        %326 = vdwg.mxu0
        %vm327 = vcmp.ge.f32.partialorder %v318, 0.0
        %vm328 = vcmp.ge.f32.partialorder %v320, 0.0
        %vm329 = vcmp.ge.f32.partialorder %v323, 0.0
        %vm330 = vcmp.ge.f32.partialorder %v325, 0.0
        %v331 = vmul.f32 %v318, 0.01
        %v332 = vmul.f32 %v320, 0.01
        %v333 = vmul.f32 %v323, 0.01
        %v334 = vmul.f32 %v325, 0.01
        %v335 = vsel %vm327, %v318, %v331
        %v336 = vsel %vm328, %v320, %v332
        %v337 = vsel %vm329, %v323, %v333
        %v338 = vsel %vm330, %v325, %v334
        %v339 = vld [vmem:[%s3] sm:$0xf]
        %v340 = vld [vmem:[%s3 + $0x4] sm:$0xf]
        %v341 = vld [vmem:[%s3 + $0x8] sm:$0xf]
        %v342 = vld [vmem:[%s3 + $0xc] sm:$0xf]
        %v343 = vld [vmem:[%s4 + $0x2] sm:$0x1]
        %v344 = vpack.c.bf16 %v336, %v335
        %v345 = vpack.c.bf16 %v338, %v337
        %v346 = vperm.slane %v343, 0
        %v351 = vunpack.c.l.b16 %v339
        %v352 = vunpack.c.l.b16 %v340
        %v353 = vunpack.c.l.b16 %v341
        %v354 = vunpack.c.l.b16 %v342
        %v355 = vpack.c.b16 %v352, %v351
        %v356 = vpack.c.b16 %v354, %v353
        %v360 = vsel %vm301, %v344, 0
        %v363 = vsel %vm301, %v345, 0
        %365 = vmatpush.bf16.msra.mxu0 0
        %366 = vmatpush.bf16.msra.mxu0 0
        %367 = vmatpush.bf16.msra.mxu0 0
        %368 = vmatpush.bf16.msra.mxu0 0
        %369 = vmatpush.bf16.msra.mxu0 0
        %370 = vmatpush.bf16.msra.mxu0 0
        %371 = vmatpush.bf16.msra.mxu0 %v356
        %372 = vmatpush.bf16.msra.mxu0 %v355
        %373 = vmatmul.bf16.gmra.mxu0 %v360
        %v374 = vpop.f32.mrf.mxu0
        %v375 = vadd.f32 %v346, %v374
        %v376 = vpop.f32.mrf.mxu0
        %v377 = vadd.f32 %v346, %v376
        %378 = vmatmul.bf16.gmra.mxu0 %v363
        %v379 = vpop.f32.mrf.mxu0
        %v380 = vadd.f32 %v346, %v379
        %v381 = vpop.f32.mrf.mxu0
        %v382 = vadd.f32 %v346, %v381
        %383 = vdwg.mxu0
        %v384 = vtanh.pop %v375
        %v385 = vtanh.pop %v377
        %v386 = vtanh.pop %v380
        %v387 = vtanh.pop %v382
        %388 = vst [vmem:[%s218] sm:$0xff] %v384
        %389 = vst [vmem:[%s218 + $0x8] sm:$0xff] %v385
        %390 = vst [vmem:[%s218 + $0x10] sm:$0xff] %v386
        %391 = vst [vmem:[%s218 + $0x18] sm:$0xff] %v387
        %s392 = sand.u32 %s137, 1
        %s393 = scalar_lea.sflag [#allocation3], %s392
        %s394 = sand.u32 %s137, 1
        %s395 = smul.addr %s394, 32
        %s396 = scalar_lea.vmem [#allocation2], %s395
        // Predicated region
        $region41: #{tpu_custom_call.1} parent=39 // pred_check
          %p397 = pneg %p147
        $region42: #{tpu_custom_call.1} parent=39 // pred_check_branch
          %399 = sbr.rel (%p397) target = $region44
        $region43: #{tpu_custom_call.1} parent=39 // pred_region
          %s400 = smul.u32 4, %s19
          %402 = vsyncadd %s393, 0
          %s403 = smul.addr %s400, 8
          %s404 = scalar_lea.hbm %s5, %s403
          %s405 = sshll.u32 %s396, 4
          %s406 = int_to_ptr.vmem [resolvable:$true] %s405
          %s407 = sshll.u32 %s404, 4
          %s408 = int_to_ptr.hbm [resolvable:$true] %s407
          %413 = dma.vmem_to_hbm [thread:$0]  %s406, 512, %s408, %s393, 128, 128, 8
        $region44: #{tpu_custom_call.1} parent=39 // pred_fallthru
          _
      $region40: #{tpu_custom_call.1} parent=5 // pred_fallthru
        _
      %p414 = scmp.le.s32.totalorder 2, %s14
      // Predicated region
      $region45: #{tpu_custom_call.1} parent=5 // pred_check
        %p415 = pneg %p414
      $region46: #{tpu_custom_call.1} parent=5 // pred_check_branch
        %417 = sbr.rel (%p415) target = $region48
      $region47: #{tpu_custom_call.1} parent=5 // pred_region
        %s418 = ssub.s32 %s14, 2
        // Predicated region
        $region49: #{tpu_custom_call.1} parent=47 // pred_check
          %p419 = pneg %p153
        $region50: #{tpu_custom_call.1} parent=47 // pred_check_branch
          %421 = sbr.rel (%p419) target = $region52
        $region51: #{tpu_custom_call.1} parent=47 // pred_region
          %s422 = sand.u32 %s138, 1
          %s423 = scalar_lea.sflag [#allocation3], %s422
          %s424 = sand.u32 %s138, 1
          %s425 = smul.addr %s424, 32
          %s426 = scalar_lea.vmem [#allocation2], %s425
          %428 = dma.done %s423, 512
        $region52: #{tpu_custom_call.1} parent=47 // pred_fallthru
          _
      $region48: #{tpu_custom_call.1} parent=5 // pred_fallthru
        _
    $region6: #{tpu_custom_call.1} parent=1 // loop_footer
      %s18 = sadd.s32 1, %s14
    $region7: #{tpu_custom_call.1} parent=1 // loop_footer_branch
      %13 = sbr.rel target = $region3
    $region8: #{tpu_custom_call.1} parent=1 // loop_exit
      _
    %429 = vsyncpa [#allocation3], 1
    %s430 = scalar_lea.sflag [#allocation3], 1
    %431 = vsyncpa %s430, 1

</llo_original>
